<compile_context>
chip_gen: v7x
topology: tpu7x:2x2x1
jax: 0.10.0
libtpu: 0.0.40
codegen_flags: <defaults>
</compile_context>

<pallas_src>
import jax
import jax.numpy as jnp
from jax.experimental import pallas as pl
from jax.experimental.pallas import tpu as pltpu

_BN_EPS = 1e-5
_ROW_TILE = 1024               # max folded-rows per tile
_VMEM_LIMIT = 32 * 1024 * 1024  # explicit scoped-VMEM budget (safe on v5e/v6e/v7x)


def _stats_kernel(xf_ref, wf_ref, sum_ref, ssq_ref):
    """Pass 1: per-lane sum / sum-of-squares of y = relu(x) @ Wf, accumulated
    over the (arbitrary) folded-M grid axis.  xf: (T, Wx), wf: (Wx, Wy),
    sum/ssq: (1, Wy) resident accumulators."""
    @pl.when(pl.program_id(0) == 0)
    def _init():
        sum_ref[...] = jnp.zeros_like(sum_ref)
        ssq_ref[...] = jnp.zeros_like(ssq_ref)

    h = jnp.maximum(xf_ref[...], 0.0).astype(jnp.bfloat16)       # ReLU (VPU) + bf16 for MXU
    y = jnp.dot(h, wf_ref[...], preferred_element_type=jnp.float32)
    sum_ref[...] += jnp.sum(y, axis=0, keepdims=True)
    ssq_ref[...] += jnp.sum(y * y, axis=0, keepdims=True)


def _apply_kernel(xf_ref, wf_ref, scale_ref, shift_ref, o_ref):
    """Pass 2: y = relu(x) @ Wf, then one fused BN affine y*scale + shift.
    Tiles along folded-M are independent -> 'parallel' grid axis."""
    h = jnp.maximum(xf_ref[...], 0.0).astype(jnp.bfloat16)
    y = jnp.dot(h, wf_ref[...], preferred_element_type=jnp.float32)
    o_ref[...] = (y * scale_ref[...] + shift_ref[...]).astype(o_ref.dtype)


def shortcut_forward(x, w1, w2, gamma, beta, stride):
    """x: (N, Cin, H, W) NCHW.  w1/w2: (C2, Cin) (== conv.weight[:, :, 0, 0]).
    gamma/beta: (2*C2,).  Returns (N, 2*C2, H', W') NCHW, float32."""
    N, Cin, H, W = x.shape
    C2 = w1.shape[0]
    s = stride

    # Branch inputs (pure subsample / shift-subsample of x; ReLU happens in-kernel,
    # and relu(0) == 0 so the appended zero row/col of F.pad(h,(-1,1,-1,1)) is exact).
    x1 = x[:, :, ::s, ::s]
    xp = jnp.pad(x[:, :, 1:, 1:], ((0, 0), (0, 0), (0, 1), (0, 1)))
    x2 = xp[:, :, ::s, ::s]
    Ho, Wo = x1.shape[2], x1.shape[3]
    M = N * Ho * Wo
    Cx = 2 * Cin          # stacked input channels
    Cy = 2 * C2           # concatenated output channels

    # Channels-last stacked layout: (M, 2*Cin) = [x1 | x2].
    x1m = jnp.transpose(x1, (0, 2, 3, 1)).reshape(M, Cin)
    x2m = jnp.transpose(x2, (0, 2, 3, 1)).reshape(M, Cin)
    xs = jnp.concatenate([x1m, x2m], axis=-1)                      # (M, Cx)

    # Block-diagonal weight: one matmul computes both 1x1 convs, pre-concatenated.
    wb = jnp.zeros((Cx, Cy), jnp.float32)
    wb = wb.at[:Cin, :C2].set(w1.T).at[Cin:, C2:].set(w2.T)

    # Lane folding: F consecutive spatial positions share one 128-lane row.
    F = max(1, -(-128 // Cx))          # ceil(128 / Cx)
    Wx, Wy = F * Cx, F * Cy
    wf = jnp.kron(jnp.eye(F, dtype=jnp.float32), wb).astype(jnp.bfloat16)  # (Wx, Wy) block-diag

    # Tile the folded-M axis; size tiles for VMEM (double-buffered x + y tiles).
    rows = -(-M // F)
    bytes_per_row = (Wx + Wy) * 4
    vmem_rows = max(8, ((8 * 1024 * 1024) // (2 * bytes_per_row)) // 8 * 8)
    tile_cap = min(_ROW_TILE, vmem_rows)
    tile_r = min(tile_cap, ((rows + 7) // 8) * 8)
    rows_pad = ((rows + tile_r - 1) // tile_r) * tile_r
    M_pad = rows_pad * F

    # Zero-padding the M axis is exact: padded rows give y == 0, contributing
    # nothing to sum / sum-of-squares (we divide by the true M below).
    xs_pad = jnp.pad(xs, ((0, M_pad - M), (0, 0)))
    xf = xs_pad.reshape(rows_pad, Wx)   # pure row-major reshape (free)

    grid = (rows_pad // tile_r,)
    x_spec = pl.BlockSpec((tile_r, Wx), lambda i: (i, 0))
    w_spec = pl.BlockSpec((Wx, Wy), lambda i: (0, 0))
    vec_spec = pl.BlockSpec((1, Wy), lambda i: (0, 0))

    # ---- Pass 1: BN statistics (accumulator outputs resident across the grid) ----
    csum, cssq = pl.pallas_call(
        _stats_kernel,
        out_shape=(jax.ShapeDtypeStruct((1, Wy), jnp.float32),
                   jax.ShapeDtypeStruct((1, Wy), jnp.float32)),
        grid=grid,
        in_specs=[x_spec, w_spec],
        out_specs=(vec_spec, vec_spec),
        compiler_params=pltpu.CompilerParams(
            dimension_semantics=("arbitrary",),
            vmem_limit_bytes=_VMEM_LIMIT),
    )(xf, wf)

    # Fold-reduce the stats back to per-channel, then build the fused affine.
    ch_sum = csum.reshape(F, Cy).sum(axis=0)
    ch_ssq = cssq.reshape(F, Cy).sum(axis=0)
    mean = ch_sum / M
    var = jnp.maximum(ch_ssq / M - mean * mean, 0.0)   # biased var (PyTorch training BN)
    inv = jax.lax.rsqrt(var + _BN_EPS)
    scale = gamma * inv
    shift = beta - mean * scale
    scale_f = jnp.tile(scale, F).reshape(1, Wy).astype(jnp.float32)
    shift_f = jnp.tile(shift, F).reshape(1, Wy).astype(jnp.float32)

    # ---- Pass 2: matmul + fused BN affine, parallel over M tiles ----
    yf = pl.pallas_call(
        _apply_kernel,
        out_shape=jax.ShapeDtypeStruct((rows_pad, Wy), jnp.float32),
        grid=grid,
        in_specs=[x_spec, w_spec, vec_spec, vec_spec],
        out_specs=pl.BlockSpec((tile_r, Wy), lambda i: (i, 0)),
        compiler_params=pltpu.CompilerParams(
            dimension_semantics=("parallel",),
            vmem_limit_bytes=_VMEM_LIMIT),
    )(xf, wf, scale_f, shift_f)

    # Unfold, drop M padding, back to NCHW.
    y = yf.reshape(M_pad, Cy)[:M]
    y = y.reshape(N, Ho, Wo, Cy).transpose(0, 3, 1, 2)
    return y


def _reference_forward(x, w1, w2, gamma, beta, stride):
    """Pure-JAX reference mirroring the PyTorch module (training-mode BN, f32)."""
    h = jnp.maximum(x, 0.0)
    h1 = h[:, :, ::stride, ::stride]
    hp = jnp.pad(h[:, :, 1:, 1:], ((0, 0), (0, 0), (0, 1), (0, 1)))
    h2 = hp[:, :, ::stride, ::stride]
    y1 = jnp.einsum('nchw,oc->nohw', h1, w1, precision=jax.lax.Precision.HIGHEST)
    y2 = jnp.einsum('nchw,oc->nohw', h2, w2, precision=jax.lax.Precision.HIGHEST)
    y = jnp.concatenate([y1, y2], axis=1)
    mean = y.mean(axis=(0, 2, 3), keepdims=True)
    var = ((y - mean) ** 2).mean(axis=(0, 2, 3), keepdims=True)
    yn = (y - mean) / jnp.sqrt(var + _BN_EPS)
    return yn * gamma.reshape(1, -1, 1, 1) + beta.reshape(1, -1, 1, 1)


if __name__ == "__main__":
    # Module config (small, consistent with Shortcut(in_ch, out_ch, stride)).
    in_ch, out_ch, stride = 4, 8, 2
    N, H, W = 2, 16, 16
    C2 = out_ch // 2

    key = jax.random.PRNGKey(0)
    kx, kw1, kw2, kg, kb = jax.random.split(key, 5)

    x = jax.random.normal(kx, (N, in_ch, H, W), dtype=jnp.float32)
    w1 = 0.3 * jax.random.normal(kw1, (C2, in_ch), dtype=jnp.float32)       # conv1.weight[:,:,0,0]
    w2 = 0.3 * jax.random.normal(kw2, (C2, in_ch), dtype=jnp.float32)       # conv2.weight[:,:,0,0]
    gamma = 1.0 + 0.2 * jax.random.normal(kg, (out_ch,), dtype=jnp.float32)  # bn.weight
    beta = 0.1 * jax.random.normal(kb, (out_ch,), dtype=jnp.float32)         # bn.bias

    out = shortcut_forward(x, w1, w2, gamma, beta, stride)
    out = jax.block_until_ready(out)

    ref = _reference_forward(x, w1, w2, gamma, beta, stride)
    assert out.shape == (N, out_ch, H // stride, W // stride), out.shape
    # Tolerance relaxed vs. the f32-HIGHEST reference because the kernel feeds
    # the MXU bf16 operands (f32 accumulation), per the performance review.
    assert jnp.allclose(out, ref, rtol=2e-2, atol=2e-2), float(jnp.max(jnp.abs(out - ref)))

    print("KERNEL_OK")
</pallas_src>

<mosaic_0001>
module attributes {stable_mosaic.version = 11 : i64} {
  func.func @_stats_kernel(%arg0: i32, %arg1: memref<8x128xf32, #tpu.memory_space<vmem>>, %arg2: memref<128x128xbf16, #tpu.memory_space<vmem>>, %arg3: memref<1x128xf32, #tpu.memory_space<vmem>>, %arg4: memref<1x128xf32, #tpu.memory_space<vmem>>) attributes {dimension_semantics = [#tpu.dimension_semantics<arbitrary>], iteration_bounds = array<i64: 1>, scalar_prefetch = 0 : i64, scratch_operands = 0 : i64, tpu.core_type = #tpu.core_type<tc>, window_params = [{transform_indices = @transform_0, window_bounds = array<i64: 8, 128>}, {pipeline_mode = #tpu.pipeline_mode<synchronous>, transform_indices = @transform_1, window_bounds = array<i64: 128, 128>}, {pipeline_mode = #tpu.pipeline_mode<synchronous>, transform_indices = @transform_2, window_bounds = array<i64: 1, 128>}, {pipeline_mode = #tpu.pipeline_mode<synchronous>, transform_indices = @transform_3, window_bounds = array<i64: 1, 128>}]} {
    %c0_i32 = arith.constant 0 : i32
    %0 = arith.cmpi eq, %arg0, %c0_i32 : i32
    %1 = arith.extui %0 : i1 to i32
    %c0_i32_0 = arith.constant 0 : i32
    %2 = arith.cmpi ne, %1, %c0_i32_0 : i32
    scf.if %2 {
      %cst_15 = arith.constant 0.000000e+00 : f32
      %20 = vector.broadcast %cst_15 : f32 to vector<1x128xf32>
      %c0_16 = arith.constant 0 : index
      %c0_17 = arith.constant 0 : index
      %21 = vector.load %arg3[%c0_16, %c0_17] : memref<1x128xf32, #tpu.memory_space<vmem>>, vector<1x128xf32>
      tpu.vector_store %arg3[%c0_16, %c0_17], %20 {strides = array<i32>} : memref<1x128xf32, #tpu.memory_space<vmem>>, vector<1x128xf32>,
      %cst_18 = arith.constant 0.000000e+00 : f32
      %22 = vector.broadcast %cst_18 : f32 to vector<1x128xf32>
      %c0_19 = arith.constant 0 : index
      %c0_20 = arith.constant 0 : index
      %23 = vector.load %arg4[%c0_19, %c0_20] : memref<1x128xf32, #tpu.memory_space<vmem>>, vector<1x128xf32>
      tpu.vector_store %arg4[%c0_19, %c0_20], %22 {strides = array<i32>} : memref<1x128xf32, #tpu.memory_space<vmem>>, vector<1x128xf32>,
    } else {
    }
    %c0 = arith.constant 0 : index
    %c0_1 = arith.constant 0 : index
    %3 = vector.load %arg1[%c0, %c0_1] : memref<8x128xf32, #tpu.memory_space<vmem>>, vector<8x128xf32>
    %cst = arith.constant 0.000000e+00 : f32
    %4 = vector.broadcast %cst : f32 to vector<8x128xf32>
    %5 = arith.maximumf %3, %4 : vector<8x128xf32>
    %6 = arith.truncf %5 : vector<8x128xf32> to vector<8x128xbf16>
    %c0_2 = arith.constant 0 : index
    %c0_3 = arith.constant 0 : index
    %7 = vector.load %arg2[%c0_2, %c0_3] : memref<128x128xbf16, #tpu.memory_space<vmem>>, vector<128x128xbf16>
    %cst_4 = arith.constant dense<0.000000e+00> : vector<8x128xf32>
    %8 = tpu.matmul %6, %7, %cst_4 {dimension_numbers = #tpu.dot_dimension_numbers<[1], [0], [0], [1], [0, 0, 1, 1], [], []>} : vector<8x128xbf16>, vector<128x128xbf16>, vector<8x128xf32> -> vector<8x128xf32>
    %c0_5 = arith.constant 0 : index
    %c0_6 = arith.constant 0 : index
    %9 = vector.load %arg3[%c0_5, %c0_6] : memref<1x128xf32, #tpu.memory_space<vmem>>, vector<1x128xf32>
    %cst_7 = arith.constant dense<0.000000e+00> : vector<128xf32>
    %10 = vector.multi_reduction <add>, %8, %cst_7 [0] : vector<8x128xf32> to vector<128xf32>
    %11 = vector.shape_cast %10 : vector<128xf32> to vector<1x128xf32>
    %12 = arith.addf %9, %11 : vector<1x128xf32>
    %c0_8 = arith.constant 0 : index
    %c0_9 = arith.constant 0 : index
    %13 = vector.load %arg3[%c0_8, %c0_9] : memref<1x128xf32, #tpu.memory_space<vmem>>, vector<1x128xf32>
    tpu.vector_store %arg3[%c0_8, %c0_9], %12 {strides = array<i32>} : memref<1x128xf32, #tpu.memory_space<vmem>>, vector<1x128xf32>,
    %c0_10 = arith.constant 0 : index
    %c0_11 = arith.constant 0 : index
    %14 = vector.load %arg4[%c0_10, %c0_11] : memref<1x128xf32, #tpu.memory_space<vmem>>, vector<1x128xf32>
    %15 = arith.mulf %8, %8 : vector<8x128xf32>
    %cst_12 = arith.constant dense<0.000000e+00> : vector<128xf32>
    %16 = vector.multi_reduction <add>, %15, %cst_12 [0] : vector<8x128xf32> to vector<128xf32>
    %17 = vector.shape_cast %16 : vector<128xf32> to vector<1x128xf32>
    %18 = arith.addf %14, %17 : vector<1x128xf32>
    %c0_13 = arith.constant 0 : index
    %c0_14 = arith.constant 0 : index
    %19 = vector.load %arg4[%c0_13, %c0_14] : memref<1x128xf32, #tpu.memory_space<vmem>>, vector<1x128xf32>
    tpu.vector_store %arg4[%c0_13, %c0_14], %18 {strides = array<i32>} : memref<1x128xf32, #tpu.memory_space<vmem>>, vector<1x128xf32>,
    return
  }
  func.func @transform_0(%arg0: i32) -> (i32, i32) {
    %c0_i32 = arith.constant 0 : i32
    %c0_i32_0 = arith.constant 0 : i32
    return %arg0, %c0_i32 : i32, i32
  }
  func.func @transform_1(%arg0: i32) -> (i32, i32) {
    %c0_i32 = arith.constant 0 : i32
    %c0_i32_0 = arith.constant 0 : i32
    %c0_i32_1 = arith.constant 0 : i32
    return %c0_i32, %c0_i32_0 : i32, i32
  }
  func.func @transform_2(%arg0: i32) -> (i32, i32) {
    %c0_i32 = arith.constant 0 : i32
    %c0_i32_0 = arith.constant 0 : i32
    %c0_i32_1 = arith.constant 0 : i32
    return %c0_i32, %c0_i32_0 : i32, i32
  }
  func.func @transform_3(%arg0: i32) -> (i32, i32) {
    %c0_i32 = arith.constant 0 : i32
    %c0_i32_0 = arith.constant 0 : i32
    %c0_i32_1 = arith.constant 0 : i32
    return %c0_i32, %c0_i32_0 : i32, i32
  }
}

</mosaic_0001>

<llo_original>
// kernel: tpu_custom_call.1
$region0: #{tpu_custom_call.1}
  #allocation0 [shape = 'u32[]', space=smem, size = 0x4, offset = 0x4, fixed_abs, tag = 'smem constant byte address 0x4 - core index']
  #allocation1 [shape = 'u32[144,128]{1,0:T(1,128)}', space=vmem, size = 0x12000, scoped, tag = 'internal scratch']
  %s0 = inlined_call_operand.hbm [shape: f32[8,128], index: 0, kind: input, shape index: {}]
  %s1 = inlined_call_operand.hbm [shape: bf16[128,128], index: 1, kind: input, shape index: {}]
  %s2 = inlined_call_operand.hbm [shape: f32[1,128], index: 2, kind: output, shape index: {0}]
  %s3 = inlined_call_operand.hbm [shape: f32[1,128], index: 3, kind: output, shape index: {1}]
  %4 = xla_tuple %s2, %s3
  %s5 = sld [smem:[#allocation0]]
  $region38: #{tpu_custom_call.1} parent=0
    _
  %s7 = ssub.s32 1, %s5
  %s8 = scalar_select 0, %s7, %s5
  $region1: #{tpu_custom_call.1} parent=0
    #allocation2 [shape = 'u8[4096]{0}', space=vmem, size = 0x1000, scoped, tag = 'input window, operand 0, single buffered']
    #allocation3 [shape = 's32[1]{0}', space=sflag, size = 0x4, scoped, tag = 'scoped memory for tpu_custom_call.1']
    #allocation4 [shape = 's32[1]{0}', space=sflag, size = 0x4, scoped, tag = 'scoped memory for tpu_custom_call.1']
    #allocation5 [shape = 'u8[32768]{0}', space=vmem, size = 0x8000, scoped, tag = 'input window, operand 1, single buffered']
    #allocation6 [shape = 's32[1]{0}', space=sflag, size = 0x4, scoped, tag = 'scoped memory for tpu_custom_call.1']
    #allocation7 [shape = 'u8[512]{0}', space=vmem, size = 0x400, scoped, tag = 'output window, operand 0, single buffered']
    #allocation8 [shape = 'u8[512]{0}', space=vmem, size = 0x400, scoped, tag = 'output window, operand 1, single buffered']
    #allocation9 [shape = 's32[1]{0}', space=sflag, size = 0x4, scoped, tag = 'scoped memory for tpu_custom_call.1']
    %9 = vsyncpa [#allocation3], 0
    %10 = vsyncpa [#allocation6], 0
    %11 = vsyncpa [#allocation4], 0
    %12 = vsyncpa [#allocation9], 0
    // Predicated region
    $region2: #{tpu_custom_call.1} parent=1 // pred_check
      _
    $region3: #{tpu_custom_call.1} parent=1 // pred_check_branch
      %14 = sbr.rel (0) target = $region5
    $region4: #{tpu_custom_call.1} parent=1 // pred_region
      %s16 = ssub.s32 128, 128
      %17 = vsyncadd [#allocation3], %s16
      %s19 = sshll.u32 [#allocation2], 4
      %s20 = int_to_ptr.vmem [resolvable:$true] %s19
      %22 = dma.hbm_to_vmem [thread:$0]  %s0, 128, %s20, [#allocation3]
    $region5: #{tpu_custom_call.1} parent=1 // pred_fallthru
      _
    // Predicated region
    $region6: #{tpu_custom_call.1} parent=1 // pred_check
      _
    $region7: #{tpu_custom_call.1} parent=1 // pred_check_branch
      %24 = sbr.rel (0) target = $region9
    $region8: #{tpu_custom_call.1} parent=1 // pred_region
      %s26 = ssub.s32 1024, 1024
      %27 = vsyncadd [#allocation6], %s26
      %s28 = sshll.u32 [#allocation5], 4
      %s29 = int_to_ptr.vmem [resolvable:$true] %s28
      %34 = dma.hbm_to_vmem [thread:$0]  %s1, 1024, %s29, [#allocation6], 64, 64, 4
    $region9: #{tpu_custom_call.1} parent=1 // pred_fallthru
      _
    // Predicated region
    $region10: #{tpu_custom_call.1} parent=1 // pred_check
      _
    $region11: #{tpu_custom_call.1} parent=1 // pred_check_branch
      %36 = sbr.rel (0) target = $region13
    $region12: #{tpu_custom_call.1} parent=1 // pred_region
      %37 = dma.done [#allocation3], 128
    $region13: #{tpu_custom_call.1} parent=1 // pred_fallthru
      _
    // Predicated region
    $region14: #{tpu_custom_call.1} parent=1 // pred_check
      _
    $region15: #{tpu_custom_call.1} parent=1 // pred_check_branch
      %39 = sbr.rel (0) target = $region17
    $region16: #{tpu_custom_call.1} parent=1 // pred_region
      %40 = dma.done [#allocation6], 1024
    $region17: #{tpu_custom_call.1} parent=1 // pred_fallthru
      _
    %p42 = scmp.eq.s32.totalorder 0, 0
    // Predicated region
    $region18: #{tpu_custom_call.1} parent=1 // pred_check
      %p43 = pneg %p42
    $region19: #{tpu_custom_call.1} parent=1 // pred_check_branch
      %45 = sbr.rel (%p43) target = $region21
    $region20: #{tpu_custom_call.1} parent=1 // pred_region
      %46 = vst [vmem:[#allocation7] sm:$0x1] 0.0
      %47 = vst [vmem:[#allocation8] sm:$0x1] 0.0
    $region21: #{tpu_custom_call.1} parent=1 // pred_fallthru
      _
    %v48 = vld [vmem:[#allocation2] sm:$0xff]
    %v49 = vmax.f32 %v48, 0.0
    %v50 = vpack.c.bf16 %v49, %v49
    %v51 = vld [vmem:[#allocation5] sm:$0xf]
    %v52 = vld [vmem:[#allocation5 + $0x4] sm:$0xf]
    %v53 = vld [vmem:[#allocation5 + $0x8] sm:$0xf]
    %v54 = vld [vmem:[#allocation5 + $0xc] sm:$0xf]
    %v55 = vld [vmem:[#allocation5 + $0x10] sm:$0xf]
    %v56 = vld [vmem:[#allocation5 + $0x14] sm:$0xf]
    %v57 = vld [vmem:[#allocation5 + $0x18] sm:$0xf]
    %v58 = vld [vmem:[#allocation5 + $0x1c] sm:$0xf]
    %v59 = vld [vmem:[#allocation5 + $0x20] sm:$0xf]
    %v60 = vld [vmem:[#allocation5 + $0x24] sm:$0xf]
    %v61 = vld [vmem:[#allocation5 + $0x28] sm:$0xf]
    %v62 = vld [vmem:[#allocation5 + $0x2c] sm:$0xf]
    %v63 = vld [vmem:[#allocation5 + $0x30] sm:$0xf]
    %v64 = vld [vmem:[#allocation5 + $0x34] sm:$0xf]
    %v65 = vld [vmem:[#allocation5 + $0x38] sm:$0xf]
    %v66 = vld [vmem:[#allocation5 + $0x3c] sm:$0xf]
    %v83 = vunpack.c.l.b16 %v51
    %v84 = vunpack.c.l.b16 %v52
    %v85 = vunpack.c.l.b16 %v53
    %v86 = vunpack.c.l.b16 %v54
    %v87 = vunpack.c.l.b16 %v55
    %v88 = vunpack.c.l.b16 %v56
    %v89 = vunpack.c.l.b16 %v57
    %v90 = vunpack.c.l.b16 %v58
    %v91 = vunpack.c.l.b16 %v59
    %v92 = vunpack.c.l.b16 %v60
    %v93 = vunpack.c.l.b16 %v61
    %v94 = vunpack.c.l.b16 %v62
    %v95 = vunpack.c.l.b16 %v63
    %v96 = vunpack.c.l.b16 %v64
    %v97 = vunpack.c.l.b16 %v65
    %v98 = vunpack.c.l.b16 %v66
    %v99 = vpack.c.b16 %v84, %v83
    %v100 = vpack.c.b16 %v86, %v85
    %v101 = vpack.c.b16 %v88, %v87
    %v102 = vpack.c.b16 %v90, %v89
    %v103 = vpack.c.b16 %v92, %v91
    %v104 = vpack.c.b16 %v94, %v93
    %v105 = vpack.c.b16 %v96, %v95
    %v106 = vpack.c.b16 %v98, %v97
    %115 = vmatprep.subr.bf16.mxu0 0
    %116 = vmatpush1.bf16.msra.mxu0 %v99
    %117 = vmatprep.subr.bf16.mxu0 0
    %118 = vmatpush1.bf16.msra.mxu0 %v100
    %119 = vmatprep.subr.bf16.mxu0 0
    %120 = vmatpush1.bf16.msra.mxu0 %v101
    %121 = vmatprep.subr.bf16.mxu0 0
    %122 = vmatpush1.bf16.msra.mxu0 %v102
    %123 = vmatprep.subr.bf16.mxu0 0
    %124 = vmatpush1.bf16.msra.mxu0 %v103
    %125 = vmatprep.subr.bf16.mxu0 0
    %126 = vmatpush1.bf16.msra.mxu0 %v104
    %127 = vmatprep.subr.bf16.mxu0 0
    %128 = vmatpush1.bf16.msra.mxu0 %v105
    %129 = vmatprep.subr.bf16.mxu0 0
    %130 = vmatpush1.bf16.msra.mxu0 %v106
    %131 = vmatprep.subr.bf16.mxu0 0
    %132 = vmatpush1.bf16.msra.mxu0 0
    %133 = vmatprep.subr.bf16.mxu0 0
    %134 = vmatpush1.bf16.msra.mxu0 0
    %135 = vmatprep.subr.bf16.mxu0 0
    %136 = vmatpush1.bf16.msra.mxu0 0
    %137 = vmatprep.subr.bf16.mxu0 0
    %138 = vmatpush1.bf16.msra.mxu0 0
    %139 = vmatprep.subr.bf16.mxu0 0
    %140 = vmatpush1.bf16.msra.mxu0 0
    %141 = vmatprep.subr.bf16.mxu0 0
    %142 = vmatpush1.bf16.msra.mxu0 0
    %143 = vmatprep.subr.bf16.mxu0 0
    %144 = vmatpush1.bf16.msra.mxu0 0
    %145 = vmatprep.subr.bf16.mxu0 0
    %146 = vmatpush1.bf16.msra.mxu0 0
    %147 = vmatprep.mubr.bf16.mxu0 0
    %148 = vmatmul.mubr.bf16.gmra.mrb[0].mxu0 %v50
    %v149 = vpop.f32.mrb[0].mxu0
    %v150 = vadd.f32 0.0, %v149
    %v151 = vpop.f32.mrb[0].mxu0
    %v152 = vpop.f32.mrb[0].mxu0
    %v153 = vpop.f32.mrb[0].mxu0
    %154 = vdwg.mxu0
    %v155 = vld [vmem:[#allocation7] sm:$0x1]
    %v156 = vrot.slane %v150, 4
    %v157 = vadd.f32 %v150, %v156
    %v158 = vrot.slane %v157, 2
    %v159 = vadd.f32 %v157, %v158
    %v160 = vrot.slane %v159, 1
    %v161 = vadd.f32 %v159, %v160
    %v162 = vadd.f32 %v155, %v161
    %163 = vst [vmem:[#allocation7] sm:$0x1] %v162
    %v164 = vld [vmem:[#allocation8] sm:$0x1]
    %v165 = vmul.f32 %v150, %v150
    %v166 = vrot.slane %v165, 4
    %v167 = vadd.f32 %v165, %v166
    %v168 = vrot.slane %v167, 2
    %v169 = vadd.f32 %v167, %v168
    %v170 = vrot.slane %v169, 1
    %v171 = vadd.f32 %v169, %v170
    %v172 = vadd.f32 %v164, %v171
    %173 = vst [vmem:[#allocation8] sm:$0x1] %v172
    // Predicated region
    $region22: #{tpu_custom_call.1} parent=1 // pred_check
      _
    $region23: #{tpu_custom_call.1} parent=1 // pred_check_branch
      %175 = sbr.rel (0) target = $region25
    $region24: #{tpu_custom_call.1} parent=1 // pred_region
      %s177 = ssub.s32 16, 16
      %178 = vsyncadd [#allocation4], %s177
      %s180 = sshll.u32 [#allocation7], 4
      %s181 = int_to_ptr.vmem [resolvable:$true] %s180
      %183 = dma.vmem_to_hbm [thread:$0]  %s181, 16, %s2, [#allocation4]
    $region25: #{tpu_custom_call.1} parent=1 // pred_fallthru
      _
    // Predicated region
    $region26: #{tpu_custom_call.1} parent=1 // pred_check
      _
    $region27: #{tpu_custom_call.1} parent=1 // pred_check_branch
      %185 = sbr.rel (0) target = $region29
    $region28: #{tpu_custom_call.1} parent=1 // pred_region
      %s187 = ssub.s32 16, 16
      %188 = vsyncadd [#allocation9], %s187
      %s190 = sshll.u32 [#allocation8], 4
      %s191 = int_to_ptr.vmem [resolvable:$true] %s190
      %193 = dma.vmem_to_hbm [thread:$0]  %s191, 16, %s3, [#allocation9]
    $region29: #{tpu_custom_call.1} parent=1 // pred_fallthru
      _
    // Predicated region
    $region30: #{tpu_custom_call.1} parent=1 // pred_check
      _
    $region31: #{tpu_custom_call.1} parent=1 // pred_check_branch
      %195 = sbr.rel (0) target = $region33
    $region32: #{tpu_custom_call.1} parent=1 // pred_region
      %196 = dma.done [#allocation4], 16
    $region33: #{tpu_custom_call.1} parent=1 // pred_fallthru
      _
    // Predicated region
    $region34: #{tpu_custom_call.1} parent=1 // pred_check
      _
    $region35: #{tpu_custom_call.1} parent=1 // pred_check_branch
      %198 = sbr.rel (0) target = $region37
    $region36: #{tpu_custom_call.1} parent=1 // pred_region
      %199 = dma.done [#allocation9], 16
    $region37: #{tpu_custom_call.1} parent=1 // pred_fallthru
      _
    %200 = vsyncpa [#allocation3], 1
    %201 = vsyncpa [#allocation6], 1
    %202 = vsyncpa [#allocation4], 1
    %203 = vsyncpa [#allocation9], 1

</llo_original>
